<compile_context>
chip_gen: v7x
topology: tpu7x:2x2x1
jax: 0.10.0
libtpu: 0.0.40
codegen_flags: <defaults>
</compile_context>

<pallas_src>
import functools

import jax
import jax.numpy as jnp
from jax.experimental import pallas as pl
from jax.experimental.pallas import tpu as pltpu


# ----------------------------- Pallas kernel --------------------------------
def actor_kernel(x_ref, seq_ref,
                 w_ih_ref, w_hh_ref,                 # (3, D_ctx, hid), (3, hid, hid) bf16
                 w1x_ref, w1h_ref, w2_ref, w3_ref,   # bf16 MLP weights
                 bias_ref,                           # (8, maxw) f32 packed biases
                 out_ref, *, max_action):
    f32 = jnp.float32
    B = x_ref.shape[0]
    HB = seq_ref.shape[0]
    H = HB // B
    hid = w_hh_ref.shape[2]
    h1d = w2_ref.shape[0]
    h2d = w2_ref.shape[1]
    adim = w3_ref.shape[1]

    # ----------------- Context: single-layer GRU, zero init hidden ----------
    # Hoisted per-gate input projections over all (H*B) rows (outside the
    # serial chain). r/z hidden biases were folded into rows 0/1 on the host.
    s2 = seq_ref[...]                                              # (H*B, D_ctx) bf16
    gi_r = jnp.dot(s2, w_ih_ref[0], preferred_element_type=f32) + bias_ref[0:1, :hid]
    gi_z = jnp.dot(s2, w_ih_ref[1], preferred_element_type=f32) + bias_ref[1:2, :hid]
    gi_n = jnp.dot(s2, w_ih_ref[2], preferred_element_type=f32) + bias_ref[2:3, :hid]
    b_hn = bias_ref[3:4, :hid]                                     # hidden n-gate bias

    w_hh_r = w_hh_ref[0]
    w_hh_z = w_hh_ref[1]
    w_hh_n = w_hh_ref[2]

    # t = 0: initial hidden state is zero -> h @ W_hh terms vanish.
    r = jax.nn.sigmoid(gi_r[0:B, :])
    z = jax.nn.sigmoid(gi_z[0:B, :])
    n = jnp.tanh(gi_n[0:B, :] + r * b_hn)
    h = (1.0 - z) * n

    # Remaining steps (small static H -> unrolled). Only the h @ W_hh dots and
    # the gate math remain on the recurrent critical path.
    for t in range(1, H):
        lo = t * B
        hb = h.astype(s2.dtype)                                    # bf16 MXU input
        gh_r = jnp.dot(hb, w_hh_r, preferred_element_type=f32)
        gh_z = jnp.dot(hb, w_hh_z, preferred_element_type=f32)
        gh_n = jnp.dot(hb, w_hh_n, preferred_element_type=f32) + b_hn
        r = jax.nn.sigmoid(gi_r[lo:lo + B, :] + gh_r)
        z = jax.nn.sigmoid(gi_z[lo:lo + B, :] + gh_z)
        n = jnp.tanh(gi_n[lo:lo + B, :] + r * gh_n)
        h = (1.0 - z) * n + z * h

    # ----------------- Actor MLP --------------------------------------------
    # cat([x, context]) @ w1  ==  x @ w1_x + context @ w1_h  (w1 split on host),
    # which avoids a non-lane-aligned in-kernel concat.
    xb = x_ref[...]                                                # (B, obs) bf16
    a1 = (jnp.dot(xb, w1x_ref[...], preferred_element_type=f32)
          + jnp.dot(h.astype(xb.dtype), w1h_ref[...], preferred_element_type=f32)
          + bias_ref[4:5, :h1d])
    a1 = jnp.maximum(a1, 0.0)
    a2 = (jnp.dot(a1.astype(xb.dtype), w2_ref[...], preferred_element_type=f32)
          + bias_ref[5:6, :h2d])
    a2 = jnp.maximum(a2, 0.0)
    y = (jnp.dot(a2.astype(xb.dtype), w3_ref[...], preferred_element_type=f32)
         + bias_ref[6:7, :adim])
    out_ref[...] = max_action * jnp.tanh(y)


# ------------------------- host-side param packing ---------------------------
def pack_params(params, *, obsr_dim):
    """One-time host-side restructuring for the kernel:
       per-gate GRU weights, folded r/z biases, split first MLP layer,
       bf16 weight cast, all biases packed into one (8, maxw) f32 buffer."""
    hid = params["w_hh"].shape[0]
    w_ih, w_hh = params["w_ih"], params["w_hh"]           # (D_ctx, 3h), (h, 3h)
    b_ih = params["b_ih"].reshape(-1)
    b_hh = params["b_hh"].reshape(-1)

    def gates(w):
        return jnp.stack([w[:, :hid], w[:, hid:2 * hid], w[:, 2 * hid:]], axis=0)

    w_ih_g = gates(w_ih).astype(jnp.bfloat16)             # (3, D_ctx, hid)
    w_hh_g = gates(w_hh).astype(jnp.bfloat16)             # (3, hid, hid)

    b_r = b_ih[:hid] + b_hh[:hid]                         # folded r bias
    b_z = b_ih[hid:2 * hid] + b_hh[hid:2 * hid]           # folded z bias
    b_in = b_ih[2 * hid:]                                 # input-side n bias
    b_hn = b_hh[2 * hid:]                                 # hidden-side n bias

    w1 = params["w1"]
    w1_x = w1[:obsr_dim].astype(jnp.bfloat16)
    w1_h = w1[obsr_dim:].astype(jnp.bfloat16)
    w2 = params["w2"].astype(jnp.bfloat16)
    w3 = params["w3"].astype(jnp.bfloat16)

    h1d, h2d = w2.shape
    adim = w3.shape[1]
    maxw = max(hid, h1d, h2d, adim)

    def row(v):
        v = v.reshape(-1).astype(jnp.float32)
        return jnp.pad(v, (0, maxw - v.shape[0]))

    bias_mat = jnp.stack([row(b_r), row(b_z), row(b_in), row(b_hn),
                          row(params["b1"]), row(params["b2"]), row(params["b3"]),
                          jnp.zeros((maxw,), jnp.float32)], axis=0)   # (8, maxw)

    return dict(w_ih_g=w_ih_g, w_hh_g=w_hh_g, w1_x=w1_x, w1_h=w1_h,
                w2=w2, w3=w3, bias=bias_mat)


# ------------------------------ wrapper --------------------------------------
def actor_forward(packed, x, pre_act, pre_rew, pre_x, *,
                  action_dim, obsr_dim, max_action):
    B = x.shape[0]
    # Glue (pure reshapes / cat of raw inputs), matching Context.forward views.
    pacts = pre_act.reshape(B, -1, action_dim)
    prews = pre_rew.reshape(B, -1, 1)
    pxs = pre_x.reshape(B, -1, obsr_dim)
    seq = jnp.concatenate([pacts, prews, pxs], axis=-1)   # (B, H, A+1+O)
    H = seq.shape[1]
    d_ctx = seq.shape[2]
    # Time-major 2D layout so the GRU input projection is a single hoisted dot.
    seq2d = jnp.transpose(seq, (1, 0, 2)).reshape(H * B, d_ctx).astype(jnp.bfloat16)
    xb = x.astype(jnp.bfloat16)

    hid = packed["w_hh_g"].shape[2]
    h1d, h2d = packed["w2"].shape
    adim = packed["w3"].shape[1]

    args = (xb, seq2d, packed["w_ih_g"], packed["w_hh_g"],
            packed["w1_x"], packed["w1_h"], packed["w2"], packed["w3"],
            packed["bias"])

    flops = 2 * (H * B * d_ctx * 3 * hid                 # hoisted input projection
                 + max(H - 1, 0) * 3 * B * hid * hid     # recurrence
                 + B * (obsr_dim * h1d + hid * h1d + h1d * h2d + h2d * adim))
    transcendentals = 3 * H * B * hid + B * adim
    bytes_accessed = (sum(int(a.size) * a.dtype.itemsize for a in args)
                      + B * adim * 4)

    vmem = pl.BlockSpec(memory_space=pltpu.MemorySpace.VMEM)
    kernel = functools.partial(actor_kernel, max_action=max_action)
    return pl.pallas_call(
        kernel,
        out_shape=jax.ShapeDtypeStruct((B, adim), jnp.float32),
        in_specs=[vmem] * len(args),
        out_specs=vmem,
        cost_estimate=pl.CostEstimate(flops=flops,
                                      transcendentals=transcendentals,
                                      bytes_accessed=bytes_accessed),
    )(*args)


# -------------------------- pure-JAX reference --------------------------------
def actor_ref(params, x, pre_act, pre_rew, pre_x, *,
              action_dim, obsr_dim, max_action, weight_dtype=jnp.float32):
    """Reference with the original (PyTorch-like) structure. weight_dtype=bf16
       reproduces the kernel's MXU precision (f32 accumulation, f32 gate math)."""
    f32 = jnp.float32

    def dot(a, w):
        return jnp.dot(a.astype(weight_dtype), w.astype(weight_dtype),
                       preferred_element_type=f32)

    B = x.shape[0]
    pacts = pre_act.reshape(B, -1, action_dim)
    prews = pre_rew.reshape(B, -1, 1)
    pxs = pre_x.reshape(B, -1, obsr_dim)
    seq = jnp.concatenate([pacts, prews, pxs], axis=-1)
    hid = params["w_hh"].shape[0]
    h = jnp.zeros((B, hid), f32)
    for t in range(seq.shape[1]):
        gi = dot(seq[:, t, :], params["w_ih"]) + params["b_ih"]
        gh = dot(h, params["w_hh"]) + params["b_hh"]
        r = jax.nn.sigmoid(gi[:, :hid] + gh[:, :hid])
        z = jax.nn.sigmoid(gi[:, hid:2 * hid] + gh[:, hid:2 * hid])
        n = jnp.tanh(gi[:, 2 * hid:] + r * gh[:, 2 * hid:])
        h = (1.0 - z) * n + z * h
    xc = jnp.concatenate([x, h], axis=-1)
    h1 = jnp.maximum(dot(xc, params["w1"]) + params["b1"], 0.0)
    h2 = jnp.maximum(dot(h1, params["w2"]) + params["b2"], 0.0)
    return max_action * jnp.tanh(dot(h2, params["w3"]) + params["b3"])


# ------------------------------ param init -----------------------------------
def init_params(key, *, action_dim, obsr_dim, hidden_sizes, ctx_hidden):
    d_ctx = action_dim + 1 + obsr_dim            # GRU input dim (input_dim_context)
    d_in = obsr_dim + ctx_hidden                 # actor input_dim[0] = obs + context
    h1, h2 = hidden_sizes

    def uni(k, shape, fan_in):
        bound = 1.0 / jnp.sqrt(jnp.float32(fan_in))
        return jax.random.uniform(k, shape, jnp.float32, -bound, bound)

    ks = jax.random.split(key, 10)
    return {
        # GRU (PyTorch layout (3*hid, in) transposed to (in, 3*hid); gate order r,z,n)
        "w_ih": uni(ks[0], (d_ctx, 3 * ctx_hidden), ctx_hidden),
        "w_hh": uni(ks[1], (ctx_hidden, 3 * ctx_hidden), ctx_hidden),
        "b_ih": uni(ks[2], (1, 3 * ctx_hidden), ctx_hidden),
        "b_hh": uni(ks[3], (1, 3 * ctx_hidden), ctx_hidden),
        # Actor MLP
        "w1": uni(ks[4], (d_in, h1), d_in),
        "b1": uni(ks[5], (1, h1), d_in),
        "w2": uni(ks[6], (h1, h2), h1),
        "b2": uni(ks[7], (1, h2), h1),
        "w3": uni(ks[8], (h2, action_dim), h2),
        "b3": uni(ks[9], (1, action_dim), h2),
    }


# --------------------------------- main ---------------------------------------
if __name__ == "__main__":
    # get_action_info(action_space) is assumed to yield a continuous space of dim 4.
    B = 8                      # fill all 8 vreg sublanes (perf feedback: batch >= 8)
    action_dim = 4
    obsr_dim = 8
    history_length = 3
    ctx_hidden = 32            # hiddens_dim_conext=[32]
    hidden_sizes = (64, 32)    # small analogue of [400, 300]
    max_action = 1.0

    key = jax.random.PRNGKey(0)
    kp, kx, ka, kr, ks = jax.random.split(key, 5)
    params = init_params(kp, action_dim=action_dim, obsr_dim=obsr_dim,
                         hidden_sizes=hidden_sizes, ctx_hidden=ctx_hidden)
    packed = pack_params(params, obsr_dim=obsr_dim)

    x = jax.random.normal(kx, (B, obsr_dim), jnp.float32)
    pre_act = jax.random.normal(ka, (B, history_length * action_dim), jnp.float32)
    pre_rew = jax.random.normal(kr, (B, history_length), jnp.float32)
    pre_x = jax.random.normal(ks, (B, history_length * obsr_dim), jnp.float32)

    out = actor_forward(packed, x, pre_act, pre_rew, pre_x,
                        action_dim=action_dim, obsr_dim=obsr_dim,
                        max_action=max_action)
    out = jax.block_until_ready(out)
    assert out.shape == (B, action_dim)

    # Matched-precision reference (bf16 weights, f32 accumulation) -> tight check.
    ref_bf16 = actor_ref(params, x, pre_act, pre_rew, pre_x,
                         action_dim=action_dim, obsr_dim=obsr_dim,
                         max_action=max_action, weight_dtype=jnp.bfloat16)
    # Full-f32 reference (PyTorch semantics) -> looser check (bf16 MXU rounding).
    ref_f32 = actor_ref(params, x, pre_act, pre_rew, pre_x,
                        action_dim=action_dim, obsr_dim=obsr_dim,
                        max_action=max_action, weight_dtype=jnp.float32)
    assert jnp.allclose(out, ref_bf16, atol=1e-2, rtol=1e-2), \
        "mismatch vs matched-precision JAX reference"
    assert jnp.allclose(out, ref_f32, atol=5e-2, rtol=5e-2), \
        "mismatch vs f32 JAX reference"

    print("KERNEL_OK")
</pallas_src>

<mosaic_0001>
module attributes {stable_mosaic.version = 11 : i64} {
  func.func @actor_kernel(%arg0: memref<8x8xbf16, #tpu.memory_space<vmem>>, %arg1: memref<24x13xbf16, #tpu.memory_space<vmem>>, %arg2: memref<3x13x32xbf16, #tpu.memory_space<vmem>>, %arg3: memref<3x32x32xbf16, #tpu.memory_space<vmem>>, %arg4: memref<8x64xbf16, #tpu.memory_space<vmem>>, %arg5: memref<32x64xbf16, #tpu.memory_space<vmem>>, %arg6: memref<64x32xbf16, #tpu.memory_space<vmem>>, %arg7: memref<32x4xbf16, #tpu.memory_space<vmem>>, %arg8: memref<8x64xf32, #tpu.memory_space<vmem>>, %arg9: memref<8x4xf32, #tpu.memory_space<vmem>>) attributes {dimension_semantics = [], scalar_prefetch = 0 : i64, scratch_operands = 0 : i64, tpu.core_type = #tpu.core_type<tc>} {
    %c0 = arith.constant 0 : index
    %c0_0 = arith.constant 0 : index
    %0 = vector.load %arg1[%c0, %c0_0] : memref<24x13xbf16, #tpu.memory_space<vmem>>, vector<24x13xbf16>
    %c0_1 = arith.constant 0 : index
    %c0_2 = arith.constant 0 : index
    %c0_3 = arith.constant 0 : index
    %1 = vector.load %arg2[%c0_1, %c0_2, %c0_3] : memref<3x13x32xbf16, #tpu.memory_space<vmem>>, vector<1x13x32xbf16>
    %2 = vector.shape_cast %1 : vector<1x13x32xbf16> to vector<13x32xbf16>
    %cst = arith.constant dense<0.000000e+00> : vector<24x32xf32>
    %3 = tpu.matmul %0, %2, %cst {dimension_numbers = #tpu.dot_dimension_numbers<[1], [0], [0], [1], [0, 0, 1, 1], [], []>} : vector<24x13xbf16>, vector<13x32xbf16>, vector<24x32xf32> -> vector<24x32xf32>
    %c0_4 = arith.constant 0 : index
    %c0_5 = arith.constant 0 : index
    %4 = vector.load %arg8[%c0_4, %c0_5] : memref<8x64xf32, #tpu.memory_space<vmem>>, vector<1x32xf32>
    %5 = vector.broadcast %4 : vector<1x32xf32> to vector<24x32xf32>
    %6 = arith.addf %3, %5 : vector<24x32xf32>
    %c1 = arith.constant 1 : index
    %c0_6 = arith.constant 0 : index
    %c0_7 = arith.constant 0 : index
    %7 = vector.load %arg2[%c1, %c0_6, %c0_7] : memref<3x13x32xbf16, #tpu.memory_space<vmem>>, vector<1x13x32xbf16>
    %8 = vector.shape_cast %7 : vector<1x13x32xbf16> to vector<13x32xbf16>
    %cst_8 = arith.constant dense<0.000000e+00> : vector<24x32xf32>
    %9 = tpu.matmul %0, %8, %cst_8 {dimension_numbers = #tpu.dot_dimension_numbers<[1], [0], [0], [1], [0, 0, 1, 1], [], []>} : vector<24x13xbf16>, vector<13x32xbf16>, vector<24x32xf32> -> vector<24x32xf32>
    %c1_9 = arith.constant 1 : index
    %c0_10 = arith.constant 0 : index
    %10 = vector.load %arg8[%c1_9, %c0_10] : memref<8x64xf32, #tpu.memory_space<vmem>>, vector<1x32xf32>
    %11 = vector.broadcast %10 : vector<1x32xf32> to vector<24x32xf32>
    %12 = arith.addf %9, %11 : vector<24x32xf32>
    %c2 = arith.constant 2 : index
    %c0_11 = arith.constant 0 : index
    %c0_12 = arith.constant 0 : index
    %13 = vector.load %arg2[%c2, %c0_11, %c0_12] : memref<3x13x32xbf16, #tpu.memory_space<vmem>>, vector<1x13x32xbf16>
    %14 = vector.shape_cast %13 : vector<1x13x32xbf16> to vector<13x32xbf16>
    %cst_13 = arith.constant dense<0.000000e+00> : vector<24x32xf32>
    %15 = tpu.matmul %0, %14, %cst_13 {dimension_numbers = #tpu.dot_dimension_numbers<[1], [0], [0], [1], [0, 0, 1, 1], [], []>} : vector<24x13xbf16>, vector<13x32xbf16>, vector<24x32xf32> -> vector<24x32xf32>
    %c2_14 = arith.constant 2 : index
    %c0_15 = arith.constant 0 : index
    %16 = vector.load %arg8[%c2_14, %c0_15] : memref<8x64xf32, #tpu.memory_space<vmem>>, vector<1x32xf32>
    %17 = vector.broadcast %16 : vector<1x32xf32> to vector<24x32xf32>
    %18 = arith.addf %15, %17 : vector<24x32xf32>
    %c3 = arith.constant 3 : index
    %c0_16 = arith.constant 0 : index
    %19 = vector.load %arg8[%c3, %c0_16] : memref<8x64xf32, #tpu.memory_space<vmem>>, vector<1x32xf32>
    %c0_17 = arith.constant 0 : index
    %c0_18 = arith.constant 0 : index
    %c0_19 = arith.constant 0 : index
    %20 = vector.load %arg3[%c0_17, %c0_18, %c0_19] : memref<3x32x32xbf16, #tpu.memory_space<vmem>>, vector<1x32x32xbf16>
    %21 = vector.shape_cast %20 : vector<1x32x32xbf16> to vector<32x32xbf16>
    %c1_20 = arith.constant 1 : index
    %c0_21 = arith.constant 0 : index
    %c0_22 = arith.constant 0 : index
    %22 = vector.load %arg3[%c1_20, %c0_21, %c0_22] : memref<3x32x32xbf16, #tpu.memory_space<vmem>>, vector<1x32x32xbf16>
    %23 = vector.shape_cast %22 : vector<1x32x32xbf16> to vector<32x32xbf16>
    %c2_23 = arith.constant 2 : index
    %c0_24 = arith.constant 0 : index
    %c0_25 = arith.constant 0 : index
    %24 = vector.load %arg3[%c2_23, %c0_24, %c0_25] : memref<3x32x32xbf16, #tpu.memory_space<vmem>>, vector<1x32x32xbf16>
    %25 = vector.shape_cast %24 : vector<1x32x32xbf16> to vector<32x32xbf16>
    %26 = vector.extract_strided_slice %6 {offsets = [0, 0], sizes = [8, 32], strides = [1, 1]} : vector<24x32xf32> to vector<8x32xf32>
    %27 = arith.negf %26 : vector<8x32xf32>
    %28 = math.exp %27 : vector<8x32xf32>
    %cst_26 = arith.constant 1.000000e+00 : f32
    %29 = vector.broadcast %cst_26 : f32 to vector<8x32xf32>
    %30 = arith.addf %29, %28 : vector<8x32xf32>
    %31 = arith.divf %29, %30 : vector<8x32xf32>
    %32 = vector.extract_strided_slice %12 {offsets = [0, 0], sizes = [8, 32], strides = [1, 1]} : vector<24x32xf32> to vector<8x32xf32>
    %33 = arith.negf %32 : vector<8x32xf32>
    %34 = math.exp %33 : vector<8x32xf32>
    %cst_27 = arith.constant 1.000000e+00 : f32
    %35 = vector.broadcast %cst_27 : f32 to vector<8x32xf32>
    %36 = arith.addf %35, %34 : vector<8x32xf32>
    %37 = arith.divf %35, %36 : vector<8x32xf32>
    %38 = vector.extract_strided_slice %18 {offsets = [0, 0], sizes = [8, 32], strides = [1, 1]} : vector<24x32xf32> to vector<8x32xf32>
    %39 = vector.broadcast %19 : vector<1x32xf32> to vector<8x32xf32>
    %40 = arith.mulf %31, %39 : vector<8x32xf32>
    %41 = arith.addf %38, %40 : vector<8x32xf32>
    %42 = math.tanh %41 : vector<8x32xf32>
    %cst_28 = arith.constant 1.000000e+00 : f32
    %43 = vector.broadcast %cst_28 : f32 to vector<8x32xf32>
    %44 = arith.subf %43, %37 : vector<8x32xf32>
    %45 = arith.mulf %44, %42 : vector<8x32xf32>
    %46 = arith.truncf %45 : vector<8x32xf32> to vector<8x32xbf16>
    %cst_29 = arith.constant dense<0.000000e+00> : vector<8x32xf32>
    %47 = tpu.matmul %46, %21, %cst_29 {dimension_numbers = #tpu.dot_dimension_numbers<[1], [0], [0], [1], [0, 0, 1, 1], [], []>} : vector<8x32xbf16>, vector<32x32xbf16>, vector<8x32xf32> -> vector<8x32xf32>
    %cst_30 = arith.constant dense<0.000000e+00> : vector<8x32xf32>
    %48 = tpu.matmul %46, %23, %cst_30 {dimension_numbers = #tpu.dot_dimension_numbers<[1], [0], [0], [1], [0, 0, 1, 1], [], []>} : vector<8x32xbf16>, vector<32x32xbf16>, vector<8x32xf32> -> vector<8x32xf32>
    %cst_31 = arith.constant dense<0.000000e+00> : vector<8x32xf32>
    %49 = tpu.matmul %46, %25, %cst_31 {dimension_numbers = #tpu.dot_dimension_numbers<[1], [0], [0], [1], [0, 0, 1, 1], [], []>} : vector<8x32xbf16>, vector<32x32xbf16>, vector<8x32xf32> -> vector<8x32xf32>
    %50 = vector.broadcast %19 : vector<1x32xf32> to vector<8x32xf32>
    %51 = arith.addf %49, %50 : vector<8x32xf32>
    %52 = vector.extract_strided_slice %6 {offsets = [8, 0], sizes = [8, 32], strides = [1, 1]} : vector<24x32xf32> to vector<8x32xf32>
    %53 = arith.addf %52, %47 : vector<8x32xf32>
    %54 = arith.negf %53 : vector<8x32xf32>
    %55 = math.exp %54 : vector<8x32xf32>
    %cst_32 = arith.constant 1.000000e+00 : f32
    %56 = vector.broadcast %cst_32 : f32 to vector<8x32xf32>
    %57 = arith.addf %56, %55 : vector<8x32xf32>
    %58 = arith.divf %56, %57 : vector<8x32xf32>
    %59 = vector.extract_strided_slice %12 {offsets = [8, 0], sizes = [8, 32], strides = [1, 1]} : vector<24x32xf32> to vector<8x32xf32>
    %60 = arith.addf %59, %48 : vector<8x32xf32>
    %61 = arith.negf %60 : vector<8x32xf32>
    %62 = math.exp %61 : vector<8x32xf32>
    %cst_33 = arith.constant 1.000000e+00 : f32
    %63 = vector.broadcast %cst_33 : f32 to vector<8x32xf32>
    %64 = arith.addf %63, %62 : vector<8x32xf32>
    %65 = arith.divf %63, %64 : vector<8x32xf32>
    %66 = vector.extract_strided_slice %18 {offsets = [8, 0], sizes = [8, 32], strides = [1, 1]} : vector<24x32xf32> to vector<8x32xf32>
    %67 = arith.mulf %58, %51 : vector<8x32xf32>
    %68 = arith.addf %66, %67 : vector<8x32xf32>
    %69 = math.tanh %68 : vector<8x32xf32>
    %cst_34 = arith.constant 1.000000e+00 : f32
    %70 = vector.broadcast %cst_34 : f32 to vector<8x32xf32>
    %71 = arith.subf %70, %65 : vector<8x32xf32>
    %72 = arith.mulf %71, %69 : vector<8x32xf32>
    %73 = arith.mulf %65, %45 : vector<8x32xf32>
    %74 = arith.addf %72, %73 : vector<8x32xf32>
    %75 = arith.truncf %74 : vector<8x32xf32> to vector<8x32xbf16>
    %cst_35 = arith.constant dense<0.000000e+00> : vector<8x32xf32>
    %76 = tpu.matmul %75, %21, %cst_35 {dimension_numbers = #tpu.dot_dimension_numbers<[1], [0], [0], [1], [0, 0, 1, 1], [], []>} : vector<8x32xbf16>, vector<32x32xbf16>, vector<8x32xf32> -> vector<8x32xf32>
    %cst_36 = arith.constant dense<0.000000e+00> : vector<8x32xf32>
    %77 = tpu.matmul %75, %23, %cst_36 {dimension_numbers = #tpu.dot_dimension_numbers<[1], [0], [0], [1], [0, 0, 1, 1], [], []>} : vector<8x32xbf16>, vector<32x32xbf16>, vector<8x32xf32> -> vector<8x32xf32>
    %cst_37 = arith.constant dense<0.000000e+00> : vector<8x32xf32>
    %78 = tpu.matmul %75, %25, %cst_37 {dimension_numbers = #tpu.dot_dimension_numbers<[1], [0], [0], [1], [0, 0, 1, 1], [], []>} : vector<8x32xbf16>, vector<32x32xbf16>, vector<8x32xf32> -> vector<8x32xf32>
    %79 = vector.broadcast %19 : vector<1x32xf32> to vector<8x32xf32>
    %80 = arith.addf %78, %79 : vector<8x32xf32>
    %81 = vector.extract_strided_slice %6 {offsets = [16, 0], sizes = [8, 32], strides = [1, 1]} : vector<24x32xf32> to vector<8x32xf32>
    %82 = arith.addf %81, %76 : vector<8x32xf32>
    %83 = arith.negf %82 : vector<8x32xf32>
    %84 = math.exp %83 : vector<8x32xf32>
    %cst_38 = arith.constant 1.000000e+00 : f32
    %85 = vector.broadcast %cst_38 : f32 to vector<8x32xf32>
    %86 = arith.addf %85, %84 : vector<8x32xf32>
    %87 = arith.divf %85, %86 : vector<8x32xf32>
    %88 = vector.extract_strided_slice %12 {offsets = [16, 0], sizes = [8, 32], strides = [1, 1]} : vector<24x32xf32> to vector<8x32xf32>
    %89 = arith.addf %88, %77 : vector<8x32xf32>
    %90 = arith.negf %89 : vector<8x32xf32>
    %91 = math.exp %90 : vector<8x32xf32>
    %cst_39 = arith.constant 1.000000e+00 : f32
    %92 = vector.broadcast %cst_39 : f32 to vector<8x32xf32>
    %93 = arith.addf %92, %91 : vector<8x32xf32>
    %94 = arith.divf %92, %93 : vector<8x32xf32>
    %95 = vector.extract_strided_slice %18 {offsets = [16, 0], sizes = [8, 32], strides = [1, 1]} : vector<24x32xf32> to vector<8x32xf32>
    %96 = arith.mulf %87, %80 : vector<8x32xf32>
    %97 = arith.addf %95, %96 : vector<8x32xf32>
    %98 = math.tanh %97 : vector<8x32xf32>
    %cst_40 = arith.constant 1.000000e+00 : f32
    %99 = vector.broadcast %cst_40 : f32 to vector<8x32xf32>
    %100 = arith.subf %99, %94 : vector<8x32xf32>
    %101 = arith.mulf %100, %98 : vector<8x32xf32>
    %102 = arith.mulf %94, %74 : vector<8x32xf32>
    %103 = arith.addf %101, %102 : vector<8x32xf32>
    %c0_41 = arith.constant 0 : index
    %c0_42 = arith.constant 0 : index
    %104 = vector.load %arg0[%c0_41, %c0_42] : memref<8x8xbf16, #tpu.memory_space<vmem>>, vector<8x8xbf16>
    %c0_43 = arith.constant 0 : index
    %c0_44 = arith.constant 0 : index
    %105 = vector.load %arg4[%c0_43, %c0_44] : memref<8x64xbf16, #tpu.memory_space<vmem>>, vector<8x64xbf16>
    %cst_45 = arith.constant dense<0.000000e+00> : vector<8x64xf32>
    %106 = tpu.matmul %104, %105, %cst_45 {dimension_numbers = #tpu.dot_dimension_numbers<[1], [0], [0], [1], [0, 0, 1, 1], [], []>} : vector<8x8xbf16>, vector<8x64xbf16>, vector<8x64xf32> -> vector<8x64xf32>
    %107 = arith.truncf %103 : vector<8x32xf32> to vector<8x32xbf16>
    %c0_46 = arith.constant 0 : index
    %c0_47 = arith.constant 0 : index
    %108 = vector.load %arg5[%c0_46, %c0_47] : memref<32x64xbf16, #tpu.memory_space<vmem>>, vector<32x64xbf16>
    %cst_48 = arith.constant dense<0.000000e+00> : vector<8x64xf32>
    %109 = tpu.matmul %107, %108, %cst_48 {dimension_numbers = #tpu.dot_dimension_numbers<[1], [0], [0], [1], [0, 0, 1, 1], [], []>} : vector<8x32xbf16>, vector<32x64xbf16>, vector<8x64xf32> -> vector<8x64xf32>
    %110 = arith.addf %106, %109 : vector<8x64xf32>
    %c4 = arith.constant 4 : index
    %c0_49 = arith.constant 0 : index
    %111 = vector.load %arg8[%c4, %c0_49] : memref<8x64xf32, #tpu.memory_space<vmem>>, vector<1x64xf32>
    %112 = vector.broadcast %111 : vector<1x64xf32> to vector<8x64xf32>
    %113 = arith.addf %110, %112 : vector<8x64xf32>
    %cst_50 = arith.constant 0.000000e+00 : f32
    %114 = vector.broadcast %cst_50 : f32 to vector<8x64xf32>
    %115 = arith.maximumf %113, %114 : vector<8x64xf32>
    %116 = arith.truncf %115 : vector<8x64xf32> to vector<8x64xbf16>
    %c0_51 = arith.constant 0 : index
    %c0_52 = arith.constant 0 : index
    %117 = vector.load %arg6[%c0_51, %c0_52] : memref<64x32xbf16, #tpu.memory_space<vmem>>, vector<64x32xbf16>
    %cst_53 = arith.constant dense<0.000000e+00> : vector<8x32xf32>
    %118 = tpu.matmul %116, %117, %cst_53 {dimension_numbers = #tpu.dot_dimension_numbers<[1], [0], [0], [1], [0, 0, 1, 1], [], []>} : vector<8x64xbf16>, vector<64x32xbf16>, vector<8x32xf32> -> vector<8x32xf32>
    %c5 = arith.constant 5 : index
    %c0_54 = arith.constant 0 : index
    %119 = vector.load %arg8[%c5, %c0_54] : memref<8x64xf32, #tpu.memory_space<vmem>>, vector<1x32xf32>
    %120 = vector.broadcast %119 : vector<1x32xf32> to vector<8x32xf32>
    %121 = arith.addf %118, %120 : vector<8x32xf32>
    %cst_55 = arith.constant 0.000000e+00 : f32
    %122 = vector.broadcast %cst_55 : f32 to vector<8x32xf32>
    %123 = arith.maximumf %121, %122 : vector<8x32xf32>
    %124 = arith.truncf %123 : vector<8x32xf32> to vector<8x32xbf16>
    %c0_56 = arith.constant 0 : index
    %c0_57 = arith.constant 0 : index
    %125 = vector.load %arg7[%c0_56, %c0_57] : memref<32x4xbf16, #tpu.memory_space<vmem>>, vector<32x4xbf16>
    %cst_58 = arith.constant dense<0.000000e+00> : vector<8x4xf32>
    %126 = tpu.matmul %124, %125, %cst_58 {dimension_numbers = #tpu.dot_dimension_numbers<[1], [0], [0], [1], [0, 0, 1, 1], [], []>} : vector<8x32xbf16>, vector<32x4xbf16>, vector<8x4xf32> -> vector<8x4xf32>
    %c6 = arith.constant 6 : index
    %c0_59 = arith.constant 0 : index
    %127 = vector.load %arg8[%c6, %c0_59] : memref<8x64xf32, #tpu.memory_space<vmem>>, vector<1x4xf32>
    %128 = vector.broadcast %127 : vector<1x4xf32> to vector<8x4xf32>
    %129 = arith.addf %126, %128 : vector<8x4xf32>
    %130 = math.tanh %129 : vector<8x4xf32>
    %cst_60 = arith.constant 1.000000e+00 : f32
    %131 = vector.broadcast %cst_60 : f32 to vector<8x4xf32>
    %132 = arith.mulf %131, %130 : vector<8x4xf32>
    %c0_61 = arith.constant 0 : index
    %c0_62 = arith.constant 0 : index
    %133 = vector.load %arg9[%c0_61, %c0_62] : memref<8x4xf32, #tpu.memory_space<vmem>>, vector<8x4xf32>
    tpu.vector_store %arg9[%c0_61, %c0_62], %132 {strides = array<i32>} : memref<8x4xf32, #tpu.memory_space<vmem>>, vector<8x4xf32>,
    return
  }
}

</mosaic_0001>

<llo_original>
// kernel: tpu_custom_call.1
$region0: #{tpu_custom_call.1}
  #allocation0 [shape = 'u32[]', space=smem, size = 0x4, offset = 0x4, fixed_abs, tag = 'smem constant byte address 0x4 - core index']
  #allocation1 [shape = 'u32[144,128]{1,0:T(1,128)}', space=vmem, size = 0x12000, scoped, tag = 'internal scratch']
  %s0 = inlined_call_operand.hbm [shape: bf16[8,8], index: 0, kind: input, shape index: {}]
  %s1 = inlined_call_operand.vmem [shape: bf16[24,13], index: 1, kind: input, shape index: {}]
  %s2 = inlined_call_operand.vmem [shape: bf16[3,13,32], index: 2, kind: input, shape index: {}]
  %s3 = inlined_call_operand.vmem [shape: bf16[3,32,32], index: 3, kind: input, shape index: {}]
  %s4 = inlined_call_operand.hbm [shape: bf16[8,64], index: 4, kind: input, shape index: {}]
  %s5 = inlined_call_operand.vmem [shape: bf16[32,64], index: 5, kind: input, shape index: {}]
  %s6 = inlined_call_operand.vmem [shape: bf16[64,32], index: 6, kind: input, shape index: {}]
  %s7 = inlined_call_operand.vmem [shape: bf16[32,4], index: 7, kind: input, shape index: {}]
  %s8 = inlined_call_operand.vmem [shape: f32[8,64], index: 8, kind: input, shape index: {}]
  %s9 = inlined_call_operand.vmem [shape: f32[8,4], index: 9, kind: output, shape index: {}]
  %s10 = sld [smem:[#allocation0]]
  $region54: #{tpu_custom_call.1} parent=0
    _
  %s12 = ssub.s32 1, %s10
  %s13 = scalar_select 0, %s12, %s10
  $region1: #{tpu_custom_call.1} parent=0
    #allocation2 [shape = 'u8[2048]{0}', space=vmem, size = 0x800, scoped, tag = 'input window, operand 0, single buffered']
    #allocation3 [shape = 's32[1]{0}', space=sflag, size = 0x4, scoped, tag = 'scoped memory for tpu_custom_call.1']
    #allocation4 [shape = 'u8[2048]{0}', space=vmem, size = 0x800, scoped, tag = 'input window, operand 4, single buffered']
    #allocation5 [shape = 's32[1]{0}', space=sflag, size = 0x4, scoped, tag = 'scoped memory for tpu_custom_call.1']
    %14 = vsyncpa [#allocation3], 0
    %15 = vsyncpa [#allocation5], 0
    // Predicated region
    $region2: #{tpu_custom_call.1} parent=1 // pred_check
      _
    $region3: #{tpu_custom_call.1} parent=1 // pred_check_branch
      %17 = sbr.rel (0) target = $region5
    $region4: #{tpu_custom_call.1} parent=1 // pred_region
      %s19 = ssub.s32 64, 64
      %20 = vsyncadd [#allocation3], %s19
      %s22 = sshll.u32 [#allocation2], 4
      %s23 = int_to_ptr.vmem [resolvable:$true] %s22
      %25 = dma.hbm_to_vmem [thread:$0]  %s0, 64, %s23, [#allocation3]
    $region5: #{tpu_custom_call.1} parent=1 // pred_fallthru
      _
    // Predicated region
    $region6: #{tpu_custom_call.1} parent=1 // pred_check
      _
    $region7: #{tpu_custom_call.1} parent=1 // pred_check_branch
      %27 = sbr.rel (0) target = $region9
    $region8: #{tpu_custom_call.1} parent=1 // pred_region
      _
    $region9: #{tpu_custom_call.1} parent=1 // pred_fallthru
      _
    // Predicated region
    $region10: #{tpu_custom_call.1} parent=1 // pred_check
      _
    $region11: #{tpu_custom_call.1} parent=1 // pred_check_branch
      %29 = sbr.rel (0) target = $region13
    $region12: #{tpu_custom_call.1} parent=1 // pred_region
      _
    $region13: #{tpu_custom_call.1} parent=1 // pred_fallthru
      _
    // Predicated region
    $region14: #{tpu_custom_call.1} parent=1 // pred_check
      _
    $region15: #{tpu_custom_call.1} parent=1 // pred_check_branch
      %31 = sbr.rel (0) target = $region17
    $region16: #{tpu_custom_call.1} parent=1 // pred_region
      _
    $region17: #{tpu_custom_call.1} parent=1 // pred_fallthru
      _
    // Predicated region
    $region18: #{tpu_custom_call.1} parent=1 // pred_check
      _
    $region19: #{tpu_custom_call.1} parent=1 // pred_check_branch
      %33 = sbr.rel (0) target = $region21
    $region20: #{tpu_custom_call.1} parent=1 // pred_region
      %s35 = ssub.s32 64, 64
      %36 = vsyncadd [#allocation5], %s35
      %s38 = sshll.u32 [#allocation4], 4
      %s39 = int_to_ptr.vmem [resolvable:$true] %s38
      %41 = dma.hbm_to_vmem [thread:$0]  %s4, 64, %s39, [#allocation5]
    $region21: #{tpu_custom_call.1} parent=1 // pred_fallthru
      _
    // Predicated region
    $region22: #{tpu_custom_call.1} parent=1 // pred_check
      _
    $region23: #{tpu_custom_call.1} parent=1 // pred_check_branch
      %43 = sbr.rel (0) target = $region25
    $region24: #{tpu_custom_call.1} parent=1 // pred_region
      _
    $region25: #{tpu_custom_call.1} parent=1 // pred_fallthru
      _
    // Predicated region
    $region26: #{tpu_custom_call.1} parent=1 // pred_check
      _
    $region27: #{tpu_custom_call.1} parent=1 // pred_check_branch
      %45 = sbr.rel (0) target = $region29
    $region28: #{tpu_custom_call.1} parent=1 // pred_region
      _
    $region29: #{tpu_custom_call.1} parent=1 // pred_fallthru
      _
    // Predicated region
    $region30: #{tpu_custom_call.1} parent=1 // pred_check
      _
    $region31: #{tpu_custom_call.1} parent=1 // pred_check_branch
      %47 = sbr.rel (0) target = $region33
    $region32: #{tpu_custom_call.1} parent=1 // pred_region
      _
    $region33: #{tpu_custom_call.1} parent=1 // pred_fallthru
      _
    // Predicated region
    $region34: #{tpu_custom_call.1} parent=1 // pred_check
      _
    $region35: #{tpu_custom_call.1} parent=1 // pred_check_branch
      %49 = sbr.rel (0) target = $region37
    $region36: #{tpu_custom_call.1} parent=1 // pred_region
      _
    $region37: #{tpu_custom_call.1} parent=1 // pred_fallthru
      _
    // Predicated region
    $region38: #{tpu_custom_call.1} parent=1 // pred_check
      _
    $region39: #{tpu_custom_call.1} parent=1 // pred_check_branch
      %51 = sbr.rel (0) target = $region41
    $region40: #{tpu_custom_call.1} parent=1 // pred_region
      %52 = dma.done [#allocation3], 64
    $region41: #{tpu_custom_call.1} parent=1 // pred_fallthru
      _
    // Predicated region
    $region42: #{tpu_custom_call.1} parent=1 // pred_check
      _
    $region43: #{tpu_custom_call.1} parent=1 // pred_check_branch
      %54 = sbr.rel (0) target = $region45
    $region44: #{tpu_custom_call.1} parent=1 // pred_region
      %55 = dma.done [#allocation5], 64
    $region45: #{tpu_custom_call.1} parent=1 // pred_fallthru
      _
    %v57 = vld [vmem:[%s1] sm:$0xf]
    %v58 = vld [vmem:[%s1 + $0x4] sm:$0xf]
    %v59 = vld [vmem:[%s1 + $0x8] sm:$0xf]
    %v60 = vld [vmem:[%s2] sm:$0xf]
    %v61 = vld [vmem:[%s2 + $0x4] sm:$0x7]
    %v62 = vld [vmem:[%s8] sm:$0x1]
    %v63 = vlaneseq
    %v64 = vshrl.u32 %v63, 7
    %v65 = vsub.s32 0, %v64
    %v66 = vrot.slane %v62, %v65
    %v70 = vunpack.c.l.b16 %v57
    %v71 = vunpack.c.l.b16 %v58
    %v72 = vunpack.c.l.b16 %v59
    %v73 = vpack.c.b16 %v71, %v70
    %v74 = vpack.c.b16 %v72, %v72
    %v77 = vunpack.c.l.b16 %v60
    %v78 = vunpack.c.l.b16 %v61
    %v79 = vpack.c.b16 %v78, %v77
    %vm80 = vcmask 105472
    %v82 = vsel %vm80, %v73, 0
    %v85 = vsel %vm80, %v74, 0
    %vm87 = vcmask 1045504
    %vm88 = vcmask 1046528
    %v89 = vsel %vm87, 4294967295, 65535
    %v90 = vsel %vm88, %v89, 0
    %v92 = vand.u32 %v79, %v90
    %94 = vmatprep.subr.bf16.mxu0 0
    %95 = vmatpush1.bf16.msra.mxu0 %v92
    %96 = vmatprep.subr.bf16.mxu0 0
    %97 = vmatpush1.bf16.msra.mxu0 0
    %98 = vmatprep.subr.bf16.mxu0 0
    %99 = vmatpush1.bf16.msra.mxu0 0
    %100 = vmatprep.subr.bf16.mxu0 0
    %101 = vmatpush1.bf16.msra.mxu0 0
    %102 = vmatprep.subr.bf16.mxu0 0
    %103 = vmatpush1.bf16.msra.mxu0 0
    %104 = vmatprep.subr.bf16.mxu0 0
    %105 = vmatpush1.bf16.msra.mxu0 0
    %106 = vmatprep.subr.bf16.mxu0 0
    %107 = vmatpush1.bf16.msra.mxu0 0
    %108 = vmatprep.subr.bf16.mxu0 0
    %109 = vmatpush1.bf16.msra.mxu0 0
    %110 = vmatprep.subr.bf16.mxu0 0
    %111 = vmatpush1.bf16.msra.mxu0 0
    %112 = vmatprep.subr.bf16.mxu0 0
    %113 = vmatpush1.bf16.msra.mxu0 0
    %114 = vmatprep.subr.bf16.mxu0 0
    %115 = vmatpush1.bf16.msra.mxu0 0
    %116 = vmatprep.subr.bf16.mxu0 0
    %117 = vmatpush1.bf16.msra.mxu0 0
    %118 = vmatprep.subr.bf16.mxu0 0
    %119 = vmatpush1.bf16.msra.mxu0 0
    %120 = vmatprep.subr.bf16.mxu0 0
    %121 = vmatpush1.bf16.msra.mxu0 0
    %122 = vmatprep.subr.bf16.mxu0 0
    %123 = vmatpush1.bf16.msra.mxu0 0
    %124 = vmatprep.subr.bf16.mxu0 0
    %125 = vmatpush1.bf16.msra.mxu0 0
    %126 = vmatprep.mubr.bf16.mxu0 0
    %127 = vmatmul.mubr.bf16.gmra.mrb[0].mxu0 %v82
    %v128 = vpop.f32.mrb[0].mxu0
    %v129 = vadd.f32 %v66, %v128
    %v130 = vpop.f32.mrb[0].mxu0
    %v131 = vpop.f32.mrb[0].mxu0
    %v132 = vadd.f32 %v66, %v131
    %v133 = vpop.f32.mrb[0].mxu0
    %134 = vmatprep.mubr.bf16.mxu0 0
    %135 = vmatmul.mubr.bf16.gmra.mrb[0].mxu0 %v85
    %v136 = vpop.f32.mrb[0].mxu0
    %v137 = vadd.f32 %v66, %v136
    %v138 = vpop.f32.mrb[0].mxu0
    %v139 = vpop.f32.mrb[0].mxu0
    %v140 = vpop.f32.mrb[0].mxu0
    %141 = vdwg.mxu0
    %s142 = scalar_lea.vmem %s2, 8
    %v143 = vld [vmem:[%s142] sm:$0xf]
    %v144 = vld [vmem:[%s142 + $0x4] sm:$0x7]
    %v145 = vld [vmem:[%s8 + $0x1] sm:$0x1]
    %v146 = vlaneseq
    %v147 = vshrl.u32 %v146, 7
    %v148 = vsub.s32 0, %v147
    %v149 = vrot.slane %v145, %v148
    %v152 = vunpack.c.l.b16 %v143
    %v153 = vunpack.c.l.b16 %v144
    %v154 = vpack.c.b16 %v153, %v152
    %v156 = vand.u32 %v154, %v90
    %158 = vmatprep.subr.bf16.mxu0 0
    %159 = vmatpush1.bf16.msra.mxu0 %v156
    %160 = vmatprep.subr.bf16.mxu0 0
    %161 = vmatpush1.bf16.msra.mxu0 0
    %162 = vmatprep.subr.bf16.mxu0 0
    %163 = vmatpush1.bf16.msra.mxu0 0
    %164 = vmatprep.subr.bf16.mxu0 0
    %165 = vmatpush1.bf16.msra.mxu0 0
    %166 = vmatprep.subr.bf16.mxu0 0
    %167 = vmatpush1.bf16.msra.mxu0 0
    %168 = vmatprep.subr.bf16.mxu0 0
    %169 = vmatpush1.bf16.msra.mxu0 0
    %170 = vmatprep.subr.bf16.mxu0 0
    %171 = vmatpush1.bf16.msra.mxu0 0
    %172 = vmatprep.subr.bf16.mxu0 0
    %173 = vmatpush1.bf16.msra.mxu0 0
    %174 = vmatprep.subr.bf16.mxu0 0
    %175 = vmatpush1.bf16.msra.mxu0 0
    %176 = vmatprep.subr.bf16.mxu0 0
    %177 = vmatpush1.bf16.msra.mxu0 0
    %178 = vmatprep.subr.bf16.mxu0 0
    %179 = vmatpush1.bf16.msra.mxu0 0
    %180 = vmatprep.subr.bf16.mxu0 0
    %181 = vmatpush1.bf16.msra.mxu0 0
    %182 = vmatprep.subr.bf16.mxu0 0
    %183 = vmatpush1.bf16.msra.mxu0 0
    %184 = vmatprep.subr.bf16.mxu0 0
    %185 = vmatpush1.bf16.msra.mxu0 0
    %186 = vmatprep.subr.bf16.mxu0 0
    %187 = vmatpush1.bf16.msra.mxu0 0
    %188 = vmatprep.subr.bf16.mxu0 0
    %189 = vmatpush1.bf16.msra.mxu0 0
    %190 = vmatprep.mubr.bf16.mxu0 0
    %191 = vmatmul.mubr.bf16.gmra.mrb[0].mxu0 %v82
    %v192 = vpop.f32.mrb[0].mxu0
    %v193 = vadd.f32 %v149, %v192
    %v194 = vpop.f32.mrb[0].mxu0
    %v195 = vpop.f32.mrb[0].mxu0
    %v196 = vadd.f32 %v149, %v195
    %v197 = vpop.f32.mrb[0].mxu0
    %198 = vmatprep.mubr.bf16.mxu0 0
    %199 = vmatmul.mubr.bf16.gmra.mrb[0].mxu0 %v85
    %v200 = vpop.f32.mrb[0].mxu0
    %v201 = vadd.f32 %v149, %v200
    %v202 = vpop.f32.mrb[0].mxu0
    %v203 = vpop.f32.mrb[0].mxu0
    %v204 = vpop.f32.mrb[0].mxu0
    %205 = vdwg.mxu0
    %s206 = scalar_lea.vmem %s2, 16
    %v207 = vld [vmem:[%s206] sm:$0xf]
    %v208 = vld [vmem:[%s206 + $0x4] sm:$0x7]
    %v209 = vld [vmem:[%s8 + $0x2] sm:$0x1]
    %v210 = vlaneseq
    %v211 = vshrl.u32 %v210, 7
    %v212 = vsub.s32 0, %v211
    %v213 = vrot.slane %v209, %v212
    %v216 = vunpack.c.l.b16 %v207
    %v217 = vunpack.c.l.b16 %v208
    %v218 = vpack.c.b16 %v217, %v216
    %v220 = vand.u32 %v218, %v90
    %222 = vmatprep.subr.bf16.mxu0 0
    %223 = vmatpush1.bf16.msra.mxu0 %v220
    %224 = vmatprep.subr.bf16.mxu0 0
    %225 = vmatpush1.bf16.msra.mxu0 0
    %226 = vmatprep.subr.bf16.mxu0 0
    %227 = vmatpush1.bf16.msra.mxu0 0
    %228 = vmatprep.subr.bf16.mxu0 0
    %229 = vmatpush1.bf16.msra.mxu0 0
    %230 = vmatprep.subr.bf16.mxu0 0
    %231 = vmatpush1.bf16.msra.mxu0 0
    %232 = vmatprep.subr.bf16.mxu0 0
    %233 = vmatpush1.bf16.msra.mxu0 0
    %234 = vmatprep.subr.bf16.mxu0 0
    %235 = vmatpush1.bf16.msra.mxu0 0
    %236 = vmatprep.subr.bf16.mxu0 0
    %237 = vmatpush1.bf16.msra.mxu0 0
    %238 = vmatprep.subr.bf16.mxu0 0
    %239 = vmatpush1.bf16.msra.mxu0 0
    %240 = vmatprep.subr.bf16.mxu0 0
    %241 = vmatpush1.bf16.msra.mxu0 0
    %242 = vmatprep.subr.bf16.mxu0 0
    %243 = vmatpush1.bf16.msra.mxu0 0
    %244 = vmatprep.subr.bf16.mxu0 0
    %245 = vmatpush1.bf16.msra.mxu0 0
    %246 = vmatprep.subr.bf16.mxu0 0
    %247 = vmatpush1.bf16.msra.mxu0 0
    %248 = vmatprep.subr.bf16.mxu0 0
    %249 = vmatpush1.bf16.msra.mxu0 0
    %250 = vmatprep.subr.bf16.mxu0 0
    %251 = vmatpush1.bf16.msra.mxu0 0
    %252 = vmatprep.subr.bf16.mxu0 0
    %253 = vmatpush1.bf16.msra.mxu0 0
    %254 = vmatprep.mubr.bf16.mxu0 0
    %255 = vmatmul.mubr.bf16.gmra.mrb[0].mxu0 %v82
    %v256 = vpop.f32.mrb[0].mxu0
    %v257 = vadd.f32 %v213, %v256
    %v258 = vpop.f32.mrb[0].mxu0
    %v259 = vpop.f32.mrb[0].mxu0
    %v260 = vadd.f32 %v213, %v259
    %v261 = vpop.f32.mrb[0].mxu0
    %262 = vmatprep.mubr.bf16.mxu0 0
    %263 = vmatmul.mubr.bf16.gmra.mrb[0].mxu0 %v85
    %v264 = vpop.f32.mrb[0].mxu0
    %v265 = vadd.f32 %v213, %v264
    %v266 = vpop.f32.mrb[0].mxu0
    %v267 = vpop.f32.mrb[0].mxu0
    %v268 = vpop.f32.mrb[0].mxu0
    %269 = vdwg.mxu0
    %v270 = vld [vmem:[%s8 + $0x3] sm:$0x1]
    %v271 = vld [vmem:[%s3] sm:$0xf]
    %v272 = vld [vmem:[%s3 + $0x4] sm:$0xf]
    %v273 = vld [vmem:[%s3 + $0x8] sm:$0xf]
    %v274 = vld [vmem:[%s3 + $0xc] sm:$0xf]
    %s275 = scalar_lea.vmem %s3, 16
    %v276 = vld [vmem:[%s275] sm:$0xf]
    %v277 = vld [vmem:[%s275 + $0x4] sm:$0xf]
    %v278 = vld [vmem:[%s275 + $0x8] sm:$0xf]
    %v279 = vld [vmem:[%s275 + $0xc] sm:$0xf]
    %s280 = scalar_lea.vmem %s3, 32
    %v281 = vld [vmem:[%s280] sm:$0xf]
    %v282 = vld [vmem:[%s280 + $0x4] sm:$0xf]
    %v283 = vld [vmem:[%s280 + $0x8] sm:$0xf]
    %v284 = vld [vmem:[%s280 + $0xc] sm:$0xf]
    %v285 = vxor.u32 %v129, 2147483648
    %v286 = vmul.f32 %v285, 1.442695
    %v287 = vpow.pop %v286
    %v288 = vadd.f32 %v287, 1.0
    %v289 = vrcp.pop %v288
    %v290 = vmul.f32 1.0, %v289
    %v291 = vxor.u32 %v193, 2147483648
    %v292 = vmul.f32 %v291, 1.442695
    %v293 = vpow.pop %v292
    %v294 = vadd.f32 %v293, 1.0
    %v295 = vrcp.pop %v294
    %v296 = vmul.f32 1.0, %v295
    %v297 = vlaneseq
    %v298 = vshrl.u32 %v297, 7
    %v299 = vsub.s32 0, %v298
    %v300 = vrot.slane %v270, %v299
    %v301 = vmul.f32 %v290, %v300
    %v302 = vadd.f32 %v257, %v301
    %v303 = vtanh.pop %v302
    %v304 = vsub.f32 1.0, %v296
    %v305 = vmul.f32 %v304, %v303
    %v306 = vpack.c.bf16 %v305, %v305
    %v311 = vunpack.c.l.b16 %v271
    %v312 = vunpack.c.l.b16 %v272
    %v313 = vunpack.c.l.b16 %v273
    %v314 = vunpack.c.l.b16 %v274
    %v315 = vpack.c.b16 %v312, %v311
    %v316 = vpack.c.b16 %v314, %v313
    %vm319 = vcmask 261120
    %v321 = vsel %vm319, %v306, 0
    %323 = vmatprep.subr.bf16.mxu0 0
    %324 = vmatpush1.bf16.msra.mxu0 %v315
    %325 = vmatprep.subr.bf16.mxu0 0
    %326 = vmatpush1.bf16.msra.mxu0 %v316
    %327 = vmatprep.subr.bf16.mxu0 0
    %328 = vmatpush1.bf16.msra.mxu0 0
    %329 = vmatprep.subr.bf16.mxu0 0
    %330 = vmatpush1.bf16.msra.mxu0 0
    %331 = vmatprep.subr.bf16.mxu0 0
    %332 = vmatpush1.bf16.msra.mxu0 0
    %333 = vmatprep.subr.bf16.mxu0 0
    %334 = vmatpush1.bf16.msra.mxu0 0
    %335 = vmatprep.subr.bf16.mxu0 0
    %336 = vmatpush1.bf16.msra.mxu0 0
    %337 = vmatprep.subr.bf16.mxu0 0
    %338 = vmatpush1.bf16.msra.mxu0 0
    %339 = vmatprep.subr.bf16.mxu0 0
    %340 = vmatpush1.bf16.msra.mxu0 0
    %341 = vmatprep.subr.bf16.mxu0 0
    %342 = vmatpush1.bf16.msra.mxu0 0
    %343 = vmatprep.subr.bf16.mxu0 0
    %344 = vmatpush1.bf16.msra.mxu0 0
    %345 = vmatprep.subr.bf16.mxu0 0
    %346 = vmatpush1.bf16.msra.mxu0 0
    %347 = vmatprep.subr.bf16.mxu0 0
    %348 = vmatpush1.bf16.msra.mxu0 0
    %349 = vmatprep.subr.bf16.mxu0 0
    %350 = vmatpush1.bf16.msra.mxu0 0
    %351 = vmatprep.subr.bf16.mxu0 0
    %352 = vmatpush1.bf16.msra.mxu0 0
    %353 = vmatprep.subr.bf16.mxu0 0
    %354 = vmatpush1.bf16.msra.mxu0 0
    %355 = vmatprep.mubr.bf16.mxu0 0
    %356 = vmatmul.mubr.bf16.gmra.mrb[0].mxu0 %v321
    %v357 = vpop.f32.mrb[0].mxu0
    %v358 = vadd.f32 0.0, %v357
    %v359 = vpop.f32.mrb[0].mxu0
    %v360 = vpop.f32.mrb[0].mxu0
    %v361 = vpop.f32.mrb[0].mxu0
    %362 = vdwg.mxu0
    %v367 = vunpack.c.l.b16 %v276
    %v368 = vunpack.c.l.b16 %v277
    %v369 = vunpack.c.l.b16 %v278
    %v370 = vunpack.c.l.b16 %v279
    %v371 = vpack.c.b16 %v368, %v367
    %v372 = vpack.c.b16 %v370, %v369
    %375 = vmatprep.subr.bf16.mxu0 0
    %376 = vmatpush1.bf16.msra.mxu0 %v371
    %377 = vmatprep.subr.bf16.mxu0 0
    %378 = vmatpush1.bf16.msra.mxu0 %v372
    %379 = vmatprep.subr.bf16.mxu0 0
    %380 = vmatpush1.bf16.msra.mxu0 0
    %381 = vmatprep.subr.bf16.mxu0 0
    %382 = vmatpush1.bf16.msra.mxu0 0
    %383 = vmatprep.subr.bf16.mxu0 0
    %384 = vmatpush1.bf16.msra.mxu0 0
    %385 = vmatprep.subr.bf16.mxu0 0
    %386 = vmatpush1.bf16.msra.mxu0 0
    %387 = vmatprep.subr.bf16.mxu0 0
    %388 = vmatpush1.bf16.msra.mxu0 0
    %389 = vmatprep.subr.bf16.mxu0 0
    %390 = vmatpush1.bf16.msra.mxu0 0
    %391 = vmatprep.subr.bf16.mxu0 0
    %392 = vmatpush1.bf16.msra.mxu0 0
    %393 = vmatprep.subr.bf16.mxu0 0
    %394 = vmatpush1.bf16.msra.mxu0 0
    %395 = vmatprep.subr.bf16.mxu0 0
    %396 = vmatpush1.bf16.msra.mxu0 0
    %397 = vmatprep.subr.bf16.mxu0 0
    %398 = vmatpush1.bf16.msra.mxu0 0
    %399 = vmatprep.subr.bf16.mxu0 0
    %400 = vmatpush1.bf16.msra.mxu0 0
    %401 = vmatprep.subr.bf16.mxu0 0
    %402 = vmatpush1.bf16.msra.mxu0 0
    %403 = vmatprep.subr.bf16.mxu0 0
    %404 = vmatpush1.bf16.msra.mxu0 0
    %405 = vmatprep.subr.bf16.mxu0 0
    %406 = vmatpush1.bf16.msra.mxu0 0
    %407 = vmatprep.mubr.bf16.mxu0 0
    %408 = vmatmul.mubr.bf16.gmra.mrb[0].mxu0 %v321
    %v409 = vpop.f32.mrb[0].mxu0
    %v410 = vadd.f32 0.0, %v409
    %v411 = vpop.f32.mrb[0].mxu0
    %v412 = vpop.f32.mrb[0].mxu0
    %v413 = vpop.f32.mrb[0].mxu0
    %414 = vdwg.mxu0
    %v419 = vunpack.c.l.b16 %v281
    %v420 = vunpack.c.l.b16 %v282
    %v421 = vunpack.c.l.b16 %v283
    %v422 = vunpack.c.l.b16 %v284
    %v423 = vpack.c.b16 %v420, %v419
    %v424 = vpack.c.b16 %v422, %v421
    %427 = vmatprep.subr.bf16.mxu0 0
    %428 = vmatpush1.bf16.msra.mxu0 %v423
    %429 = vmatprep.subr.bf16.mxu0 0
    %430 = vmatpush1.bf16.msra.mxu0 %v424
    %431 = vmatprep.subr.bf16.mxu0 0
    %432 = vmatpush1.bf16.msra.mxu0 0
    %433 = vmatprep.subr.bf16.mxu0 0
    %434 = vmatpush1.bf16.msra.mxu0 0
    %435 = vmatprep.subr.bf16.mxu0 0
    %436 = vmatpush1.bf16.msra.mxu0 0
    %437 = vmatprep.subr.bf16.mxu0 0
    %438 = vmatpush1.bf16.msra.mxu0 0
    %439 = vmatprep.subr.bf16.mxu0 0
    %440 = vmatpush1.bf16.msra.mxu0 0
    %441 = vmatprep.subr.bf16.mxu0 0
    %442 = vmatpush1.bf16.msra.mxu0 0
    %443 = vmatprep.subr.bf16.mxu0 0
    %444 = vmatpush1.bf16.msra.mxu0 0
    %445 = vmatprep.subr.bf16.mxu0 0
    %446 = vmatpush1.bf16.msra.mxu0 0
    %447 = vmatprep.subr.bf16.mxu0 0
    %448 = vmatpush1.bf16.msra.mxu0 0
    %449 = vmatprep.subr.bf16.mxu0 0
    %450 = vmatpush1.bf16.msra.mxu0 0
    %451 = vmatprep.subr.bf16.mxu0 0
    %452 = vmatpush1.bf16.msra.mxu0 0
    %453 = vmatprep.subr.bf16.mxu0 0
    %454 = vmatpush1.bf16.msra.mxu0 0
    %455 = vmatprep.subr.bf16.mxu0 0
    %456 = vmatpush1.bf16.msra.mxu0 0
    %457 = vmatprep.subr.bf16.mxu0 0
    %458 = vmatpush1.bf16.msra.mxu0 0
    %459 = vmatprep.mubr.bf16.mxu0 0
    %460 = vmatmul.mubr.bf16.gmra.mrb[0].mxu0 %v321
    %v461 = vpop.f32.mrb[0].mxu0
    %v462 = vadd.f32 %v300, %v461
    %v463 = vpop.f32.mrb[0].mxu0
    %v464 = vpop.f32.mrb[0].mxu0
    %v465 = vpop.f32.mrb[0].mxu0
    %466 = vdwg.mxu0
    %v467 = vadd.f32 %v132, %v358
    %v468 = vxor.u32 %v467, 2147483648
    %v469 = vmul.f32 %v468, 1.442695
    %v470 = vpow.pop %v469
    %v471 = vadd.f32 %v470, 1.0
    %v472 = vrcp.pop %v471
    %v473 = vmul.f32 1.0, %v472
    %v474 = vadd.f32 %v196, %v410
    %v475 = vxor.u32 %v474, 2147483648
    %v476 = vmul.f32 %v475, 1.442695
    %v477 = vpow.pop %v476
    %v478 = vadd.f32 %v477, 1.0
    %v479 = vrcp.pop %v478
    %v480 = vmul.f32 1.0, %v479
    %v481 = vmul.f32 %v473, %v462
    %v482 = vadd.f32 %v260, %v481
    %v483 = vtanh.pop %v482
    %v484 = vsub.f32 1.0, %v480
    %v485 = vmul.f32 %v484, %v483
    %v486 = vmul.f32 %v480, %v305
    %v487 = vadd.f32 %v485, %v486
    %v488 = vpack.c.bf16 %v487, %v487
    %v490 = vsel %vm319, %v488, 0
    %492 = vmatprep.subr.bf16.mxu0 0
    %493 = vmatpush1.bf16.msra.mxu0 %v315
    %494 = vmatprep.subr.bf16.mxu0 0
    %495 = vmatpush1.bf16.msra.mxu0 %v316
    %496 = vmatprep.subr.bf16.mxu0 0
    %497 = vmatpush1.bf16.msra.mxu0 0
    %498 = vmatprep.subr.bf16.mxu0 0
    %499 = vmatpush1.bf16.msra.mxu0 0
    %500 = vmatprep.subr.bf16.mxu0 0
    %501 = vmatpush1.bf16.msra.mxu0 0
    %502 = vmatprep.subr.bf16.mxu0 0
    %503 = vmatpush1.bf16.msra.mxu0 0
    %504 = vmatprep.subr.bf16.mxu0 0
    %505 = vmatpush1.bf16.msra.mxu0 0
    %506 = vmatprep.subr.bf16.mxu0 0
    %507 = vmatpush1.bf16.msra.mxu0 0
    %508 = vmatprep.subr.bf16.mxu0 0
    %509 = vmatpush1.bf16.msra.mxu0 0
    %510 = vmatprep.subr.bf16.mxu0 0
    %511 = vmatpush1.bf16.msra.mxu0 0
    %512 = vmatprep.subr.bf16.mxu0 0
    %513 = vmatpush1.bf16.msra.mxu0 0
    %514 = vmatprep.subr.bf16.mxu0 0
    %515 = vmatpush1.bf16.msra.mxu0 0
    %516 = vmatprep.subr.bf16.mxu0 0
    %517 = vmatpush1.bf16.msra.mxu0 0
    %518 = vmatprep.subr.bf16.mxu0 0
    %519 = vmatpush1.bf16.msra.mxu0 0
    %520 = vmatprep.subr.bf16.mxu0 0
    %521 = vmatpush1.bf16.msra.mxu0 0
    %522 = vmatprep.subr.bf16.mxu0 0
    %523 = vmatpush1.bf16.msra.mxu0 0
    %524 = vmatprep.mubr.bf16.mxu0 0
    %525 = vmatmul.mubr.bf16.gmra.mrb[0].mxu0 %v490
    %v526 = vpop.f32.mrb[0].mxu0
    %v527 = vadd.f32 0.0, %v526
    %v528 = vpop.f32.mrb[0].mxu0
    %v529 = vpop.f32.mrb[0].mxu0
    %v530 = vpop.f32.mrb[0].mxu0
    %531 = vdwg.mxu0
    %532 = vmatprep.subr.bf16.mxu0 0
    %533 = vmatpush1.bf16.msra.mxu0 %v371
    %534 = vmatprep.subr.bf16.mxu0 0
    %535 = vmatpush1.bf16.msra.mxu0 %v372
    %536 = vmatprep.subr.bf16.mxu0 0
    %537 = vmatpush1.bf16.msra.mxu0 0
    %538 = vmatprep.subr.bf16.mxu0 0
    %539 = vmatpush1.bf16.msra.mxu0 0
    %540 = vmatprep.subr.bf16.mxu0 0
    %541 = vmatpush1.bf16.msra.mxu0 0
    %542 = vmatprep.subr.bf16.mxu0 0
    %543 = vmatpush1.bf16.msra.mxu0 0
    %544 = vmatprep.subr.bf16.mxu0 0
    %545 = vmatpush1.bf16.msra.mxu0 0
    %546 = vmatprep.subr.bf16.mxu0 0
    %547 = vmatpush1.bf16.msra.mxu0 0
    %548 = vmatprep.subr.bf16.mxu0 0
    %549 = vmatpush1.bf16.msra.mxu0 0
    %550 = vmatprep.subr.bf16.mxu0 0
    %551 = vmatpush1.bf16.msra.mxu0 0
    %552 = vmatprep.subr.bf16.mxu0 0
    %553 = vmatpush1.bf16.msra.mxu0 0
    %554 = vmatprep.subr.bf16.mxu0 0
    %555 = vmatpush1.bf16.msra.mxu0 0
    %556 = vmatprep.subr.bf16.mxu0 0
    %557 = vmatpush1.bf16.msra.mxu0 0
    %558 = vmatprep.subr.bf16.mxu0 0
    %559 = vmatpush1.bf16.msra.mxu0 0
    %560 = vmatprep.subr.bf16.mxu0 0
    %561 = vmatpush1.bf16.msra.mxu0 0
    %562 = vmatprep.subr.bf16.mxu0 0
    %563 = vmatpush1.bf16.msra.mxu0 0
    %564 = vmatprep.mubr.bf16.mxu0 0
    %565 = vmatmul.mubr.bf16.gmra.mrb[0].mxu0 %v490
    %v566 = vpop.f32.mrb[0].mxu0
    %v567 = vadd.f32 0.0, %v566
    %v568 = vpop.f32.mrb[0].mxu0
    %v569 = vpop.f32.mrb[0].mxu0
    %v570 = vpop.f32.mrb[0].mxu0
    %571 = vdwg.mxu0
    %572 = vmatprep.subr.bf16.mxu0 0
    %573 = vmatpush1.bf16.msra.mxu0 %v423
    %574 = vmatprep.subr.bf16.mxu0 0
    %575 = vmatpush1.bf16.msra.mxu0 %v424
    %576 = vmatprep.subr.bf16.mxu0 0
    %577 = vmatpush1.bf16.msra.mxu0 0
    %578 = vmatprep.subr.bf16.mxu0 0
    %579 = vmatpush1.bf16.msra.mxu0 0
    %580 = vmatprep.subr.bf16.mxu0 0
    %581 = vmatpush1.bf16.msra.mxu0 0
    %582 = vmatprep.subr.bf16.mxu0 0
    %583 = vmatpush1.bf16.msra.mxu0 0
    %584 = vmatprep.subr.bf16.mxu0 0
    %585 = vmatpush1.bf16.msra.mxu0 0
    %586 = vmatprep.subr.bf16.mxu0 0
    %587 = vmatpush1.bf16.msra.mxu0 0
    %588 = vmatprep.subr.bf16.mxu0 0
    %589 = vmatpush1.bf16.msra.mxu0 0
    %590 = vmatprep.subr.bf16.mxu0 0
    %591 = vmatpush1.bf16.msra.mxu0 0
    %592 = vmatprep.subr.bf16.mxu0 0
    %593 = vmatpush1.bf16.msra.mxu0 0
    %594 = vmatprep.subr.bf16.mxu0 0
    %595 = vmatpush1.bf16.msra.mxu0 0
    %596 = vmatprep.subr.bf16.mxu0 0
    %597 = vmatpush1.bf16.msra.mxu0 0
    %598 = vmatprep.subr.bf16.mxu0 0
    %599 = vmatpush1.bf16.msra.mxu0 0
    %600 = vmatprep.subr.bf16.mxu0 0
    %601 = vmatpush1.bf16.msra.mxu0 0
    %602 = vmatprep.subr.bf16.mxu0 0
    %603 = vmatpush1.bf16.msra.mxu0 0
    %604 = vmatprep.mubr.bf16.mxu0 0
    %605 = vmatmul.mubr.bf16.gmra.mrb[0].mxu0 %v490
    %v606 = vpop.f32.mrb[0].mxu0
    %v607 = vadd.f32 %v300, %v606
    %v608 = vpop.f32.mrb[0].mxu0
    %v609 = vpop.f32.mrb[0].mxu0
    %v610 = vpop.f32.mrb[0].mxu0
    %611 = vdwg.mxu0
    %v612 = vadd.f32 %v137, %v527
    %v613 = vxor.u32 %v612, 2147483648
    %v614 = vmul.f32 %v613, 1.442695
    %v615 = vpow.pop %v614
    %v616 = vadd.f32 %v615, 1.0
    %v617 = vrcp.pop %v616
    %v618 = vmul.f32 1.0, %v617
    %v619 = vadd.f32 %v201, %v567
    %v620 = vxor.u32 %v619, 2147483648
    %v621 = vmul.f32 %v620, 1.442695
    %v622 = vpow.pop %v621
    %v623 = vadd.f32 %v622, 1.0
    %v624 = vrcp.pop %v623
    %v625 = vmul.f32 1.0, %v624
    %v626 = vmul.f32 %v618, %v607
    %v627 = vadd.f32 %v265, %v626
    %v628 = vtanh.pop %v627
    %v629 = vsub.f32 1.0, %v625
    %v630 = vmul.f32 %v629, %v628
    %v631 = vmul.f32 %v625, %v487
    %v632 = vadd.f32 %v630, %v631
    %v633 = vld [vmem:[#allocation2] sm:$0xf]
    %v634 = vld [vmem:[#allocation4] sm:$0xf]
    %v635 = vpack.c.bf16 %v632, %v632
    %v636 = vld [vmem:[%s5] sm:$0xf]
    %v637 = vld [vmem:[%s5 + $0x4] sm:$0xf]
    %v638 = vld [vmem:[%s5 + $0x8] sm:$0xf]
    %v639 = vld [vmem:[%s5 + $0xc] sm:$0xf]
    %v644 = vunpack.c.l.b16 %v636
    %v645 = vunpack.c.l.b16 %v637
    %v646 = vunpack.c.l.b16 %v638
    %v647 = vunpack.c.l.b16 %v639
    %v648 = vpack.c.b16 %v645, %v644
    %v649 = vpack.c.b16 %v647, %v646
    %v653 = vsel %vm319, %v635, 0
    %655 = vmatprep.subr.bf16.mxu0 0
    %656 = vmatpush1.bf16.msra.mxu0 %v648
    %657 = vmatprep.subr.bf16.mxu0 0
    %658 = vmatpush1.bf16.msra.mxu0 %v649
    %659 = vmatprep.subr.bf16.mxu0 0
    %660 = vmatpush1.bf16.msra.mxu0 0
    %661 = vmatprep.subr.bf16.mxu0 0
    %662 = vmatpush1.bf16.msra.mxu0 0
    %663 = vmatprep.subr.bf16.mxu0 0
    %664 = vmatpush1.bf16.msra.mxu0 0
    %665 = vmatprep.subr.bf16.mxu0 0
    %666 = vmatpush1.bf16.msra.mxu0 0
    %667 = vmatprep.subr.bf16.mxu0 0
    %668 = vmatpush1.bf16.msra.mxu0 0
    %669 = vmatprep.subr.bf16.mxu0 0
    %670 = vmatpush1.bf16.msra.mxu0 0
    %671 = vmatprep.subr.bf16.mxu0 0
    %672 = vmatpush1.bf16.msra.mxu0 0
    %673 = vmatprep.subr.bf16.mxu0 0
    %674 = vmatpush1.bf16.msra.mxu0 0
    %675 = vmatprep.subr.bf16.mxu0 0
    %676 = vmatpush1.bf16.msra.mxu0 0
    %677 = vmatprep.subr.bf16.mxu0 0
    %678 = vmatpush1.bf16.msra.mxu0 0
    %679 = vmatprep.subr.bf16.mxu0 0
    %680 = vmatpush1.bf16.msra.mxu0 0
    %681 = vmatprep.subr.bf16.mxu0 0
    %682 = vmatpush1.bf16.msra.mxu0 0
    %683 = vmatprep.subr.bf16.mxu0 0
    %684 = vmatpush1.bf16.msra.mxu0 0
    %685 = vmatprep.subr.bf16.mxu0 0
    %686 = vmatpush1.bf16.msra.mxu0 0
    %687 = vmatprep.mubr.bf16.mxu0 0
    %688 = vmatmul.mubr.bf16.gmra.mrb[0].mxu0 %v653
    %v689 = vpop.f32.mrb[0].mxu0
    %v690 = vadd.f32 0.0, %v689
    %v691 = vpop.f32.mrb[0].mxu0
    %v692 = vpop.f32.mrb[0].mxu0
    %v693 = vpop.f32.mrb[0].mxu0
    %694 = vdwg.mxu0
    %vm695 = vcmask 64512
    %v697 = vsel %vm695, %v633, 0
    %vm699 = vcmask 1043456
    %v701 = vsel %vm699, %v634, 0
    %703 = vmatprep.subr.bf16.mxu0 0
    %704 = vmatpush1.bf16.msra.mxu0 %v701
    %705 = vmatprep.subr.bf16.mxu0 0
    %706 = vmatpush1.bf16.msra.mxu0 0
    %707 = vmatprep.subr.bf16.mxu0 0
    %708 = vmatpush1.bf16.msra.mxu0 0
    %709 = vmatprep.subr.bf16.mxu0 0
    %710 = vmatpush1.bf16.msra.mxu0 0
    %711 = vmatprep.subr.bf16.mxu0 0
    %712 = vmatpush1.bf16.msra.mxu0 0
    %713 = vmatprep.subr.bf16.mxu0 0
    %714 = vmatpush1.bf16.msra.mxu0 0
    %715 = vmatprep.subr.bf16.mxu0 0
    %716 = vmatpush1.bf16.msra.mxu0 0
    %717 = vmatprep.subr.bf16.mxu0 0
    %718 = vmatpush1.bf16.msra.mxu0 0
    %719 = vmatprep.subr.bf16.mxu0 0
    %720 = vmatpush1.bf16.msra.mxu0 0
    %721 = vmatprep.subr.bf16.mxu0 0
    %722 = vmatpush1.bf16.msra.mxu0 0
    %723 = vmatprep.subr.bf16.mxu0 0
    %724 = vmatpush1.bf16.msra.mxu0 0
    %725 = vmatprep.subr.bf16.mxu0 0
    %726 = vmatpush1.bf16.msra.mxu0 0
    %727 = vmatprep.subr.bf16.mxu0 0
    %728 = vmatpush1.bf16.msra.mxu0 0
    %729 = vmatprep.subr.bf16.mxu0 0
    %730 = vmatpush1.bf16.msra.mxu0 0
    %731 = vmatprep.subr.bf16.mxu0 0
    %732 = vmatpush1.bf16.msra.mxu0 0
    %733 = vmatprep.subr.bf16.mxu0 0
    %734 = vmatpush1.bf16.msra.mxu0 0
    %735 = vmatprep.mubr.bf16.mxu0 0
    %736 = vmatmul.mubr.bf16.gmra.mrb[0].mxu0 %v697
    %v737 = vpop.f32.mrb[0].mxu0
    %v738 = vadd.f32 %v690, %v737
    %v739 = vpop.f32.mrb[0].mxu0
    %v740 = vpop.f32.mrb[0].mxu0
    %v741 = vpop.f32.mrb[0].mxu0
    %742 = vdwg.mxu0
    %v743 = vld [vmem:[%s8 + $0x4] sm:$0x1]
    %v744 = vlaneseq
    %v745 = vshrl.u32 %v744, 7
    %v746 = vsub.s32 0, %v745
    %v747 = vrot.slane %v743, %v746
    %v748 = vadd.f32 %v738, %v747
    %v749 = vmax.f32 %v748, 0.0
    %v750 = vpack.c.bf16 %v749, %v749
    %v751 = vld [vmem:[%s6] sm:$0xf]
    %v752 = vld [vmem:[%s6 + $0x4] sm:$0xf]
    %v753 = vld [vmem:[%s6 + $0x8] sm:$0xf]
    %v754 = vld [vmem:[%s6 + $0xc] sm:$0xf]
    %v755 = vld [vmem:[%s6 + $0x10] sm:$0xf]
    %v756 = vld [vmem:[%s6 + $0x14] sm:$0xf]
    %v757 = vld [vmem:[%s6 + $0x18] sm:$0xf]
    %v758 = vld [vmem:[%s6 + $0x1c] sm:$0xf]
    %v759 = vld [vmem:[%s8 + $0x5] sm:$0x1]
    %v760 = vlaneseq
    %v761 = vshrl.u32 %v760, 7
    %v762 = vsub.s32 0, %v761
    %v763 = vrot.slane %v759, %v762
    %v772 = vunpack.c.l.b16 %v751
    %v773 = vunpack.c.l.b16 %v752
    %v774 = vunpack.c.l.b16 %v753
    %v775 = vunpack.c.l.b16 %v754
    %v776 = vunpack.c.l.b16 %v755
    %v777 = vunpack.c.l.b16 %v756
    %v778 = vunpack.c.l.b16 %v757
    %v779 = vunpack.c.l.b16 %v758
    %v780 = vpack.c.b16 %v773, %v772
    %v781 = vpack.c.b16 %v775, %v774
    %v782 = vpack.c.b16 %v777, %v776
    %v783 = vpack.c.b16 %v779, %v778
    %vm788 = vcmask 523264
    %v790 = vsel %vm788, %v750, 0
    %792 = vmatprep.subr.bf16.mxu0 0
    %793 = vmatpush1.bf16.msra.mxu0 %v780
    %794 = vmatprep.subr.bf16.mxu0 0
    %795 = vmatpush1.bf16.msra.mxu0 %v781
    %796 = vmatprep.subr.bf16.mxu0 0
    %797 = vmatpush1.bf16.msra.mxu0 %v782
    %798 = vmatprep.subr.bf16.mxu0 0
    %799 = vmatpush1.bf16.msra.mxu0 %v783
    %800 = vmatprep.subr.bf16.mxu0 0
    %801 = vmatpush1.bf16.msra.mxu0 0
    %802 = vmatprep.subr.bf16.mxu0 0
    %803 = vmatpush1.bf16.msra.mxu0 0
    %804 = vmatprep.subr.bf16.mxu0 0
    %805 = vmatpush1.bf16.msra.mxu0 0
    %806 = vmatprep.subr.bf16.mxu0 0
    %807 = vmatpush1.bf16.msra.mxu0 0
    %808 = vmatprep.subr.bf16.mxu0 0
    %809 = vmatpush1.bf16.msra.mxu0 0
    %810 = vmatprep.subr.bf16.mxu0 0
    %811 = vmatpush1.bf16.msra.mxu0 0
    %812 = vmatprep.subr.bf16.mxu0 0
    %813 = vmatpush1.bf16.msra.mxu0 0
    %814 = vmatprep.subr.bf16.mxu0 0
    %815 = vmatpush1.bf16.msra.mxu0 0
    %816 = vmatprep.subr.bf16.mxu0 0
    %817 = vmatpush1.bf16.msra.mxu0 0
    %818 = vmatprep.subr.bf16.mxu0 0
    %819 = vmatpush1.bf16.msra.mxu0 0
    %820 = vmatprep.subr.bf16.mxu0 0
    %821 = vmatpush1.bf16.msra.mxu0 0
    %822 = vmatprep.subr.bf16.mxu0 0
    %823 = vmatpush1.bf16.msra.mxu0 0
    %824 = vmatprep.mubr.bf16.mxu0 0
    %825 = vmatmul.mubr.bf16.gmra.mrb[0].mxu0 %v790
    %v826 = vpop.f32.mrb[0].mxu0
    %v827 = vadd.f32 %v763, %v826
    %v828 = vpop.f32.mrb[0].mxu0
    %v829 = vpop.f32.mrb[0].mxu0
    %v830 = vpop.f32.mrb[0].mxu0
    %831 = vdwg.mxu0
    %v832 = vmax.f32 %v827, 0.0
    %v833 = vpack.c.bf16 %v832, %v832
    %v834 = vld [vmem:[%s7] sm:$0xf]
    %v835 = vld [vmem:[%s7 + $0x4] sm:$0xf]
    %v836 = vld [vmem:[%s7 + $0x8] sm:$0xf]
    %v837 = vld [vmem:[%s7 + $0xc] sm:$0xf]
    %v838 = vld [vmem:[%s8 + $0x6] sm:$0x1]
    %v839 = vlaneseq
    %v840 = vshrl.u32 %v839, 7
    %v841 = vsub.s32 0, %v840
    %v842 = vrot.slane %v838, %v841
    %v847 = vunpack.c.l.b16 %v834
    %v848 = vunpack.c.l.b16 %v835
    %v849 = vunpack.c.l.b16 %v836
    %v850 = vunpack.c.l.b16 %v837
    %v851 = vpack.c.b16 %v848, %v847
    %v852 = vpack.c.b16 %v850, %v849
    %v856 = vsel %vm319, %v833, 0
    %858 = vmatprep.subr.bf16.mxu0 0
    %859 = vmatpush1.bf16.msra.mxu0 %v851
    %860 = vmatprep.subr.bf16.mxu0 0
    %861 = vmatpush1.bf16.msra.mxu0 %v852
    %862 = vmatprep.subr.bf16.mxu0 0
    %863 = vmatpush1.bf16.msra.mxu0 0
    %864 = vmatprep.subr.bf16.mxu0 0
    %865 = vmatpush1.bf16.msra.mxu0 0
    %866 = vmatprep.subr.bf16.mxu0 0
    %867 = vmatpush1.bf16.msra.mxu0 0
    %868 = vmatprep.subr.bf16.mxu0 0
    %869 = vmatpush1.bf16.msra.mxu0 0
    %870 = vmatprep.subr.bf16.mxu0 0
    %871 = vmatpush1.bf16.msra.mxu0 0
    %872 = vmatprep.subr.bf16.mxu0 0
    %873 = vmatpush1.bf16.msra.mxu0 0
    %874 = vmatprep.subr.bf16.mxu0 0
    %875 = vmatpush1.bf16.msra.mxu0 0
    %876 = vmatprep.subr.bf16.mxu0 0
    %877 = vmatpush1.bf16.msra.mxu0 0
    %878 = vmatprep.subr.bf16.mxu0 0
    %879 = vmatpush1.bf16.msra.mxu0 0
    %880 = vmatprep.subr.bf16.mxu0 0
    %881 = vmatpush1.bf16.msra.mxu0 0
    %882 = vmatprep.subr.bf16.mxu0 0
    %883 = vmatpush1.bf16.msra.mxu0 0
    %884 = vmatprep.subr.bf16.mxu0 0
    %885 = vmatpush1.bf16.msra.mxu0 0
    %886 = vmatprep.subr.bf16.mxu0 0
    %887 = vmatpush1.bf16.msra.mxu0 0
    %888 = vmatprep.subr.bf16.mxu0 0
    %889 = vmatpush1.bf16.msra.mxu0 0
    %890 = vmatprep.mubr.bf16.mxu0 0
    %891 = vmatmul.mubr.bf16.gmra.mrb[0].mxu0 %v856
    %v892 = vpop.f32.mrb[0].mxu0
    %v893 = vadd.f32 %v842, %v892
    %v894 = vpop.f32.mrb[0].mxu0
    %v895 = vpop.f32.mrb[0].mxu0
    %v896 = vpop.f32.mrb[0].mxu0
    %897 = vdwg.mxu0
    %v898 = vtanh.pop %v893
    %vm899 = vcmask 31744
    %900 = vst.msk [vmem:[%s9] sm:$0xff] %vm899, %v898
    // Predicated region
    $region46: #{tpu_custom_call.1} parent=1 // pred_check
      _
    $region47: #{tpu_custom_call.1} parent=1 // pred_check_branch
      %902 = sbr.rel (0) target = $region49
    $region48: #{tpu_custom_call.1} parent=1 // pred_region
      _
    $region49: #{tpu_custom_call.1} parent=1 // pred_fallthru
      _
    // Predicated region
    $region50: #{tpu_custom_call.1} parent=1 // pred_check
      _
    $region51: #{tpu_custom_call.1} parent=1 // pred_check_branch
      %904 = sbr.rel (0) target = $region53
    $region52: #{tpu_custom_call.1} parent=1 // pred_region
      _
    $region53: #{tpu_custom_call.1} parent=1 // pred_fallthru
      _
    %905 = vsyncpa [#allocation3], 1
    %906 = vsyncpa [#allocation5], 1

</llo_original>
